<compile_context>
chip_gen: v6e
topology: v6e:2x2x1
jax: 0.10.0
libtpu: 0.0.40
codegen_flags: <defaults>
</compile_context>

<pallas_src>
import jax
import jax.numpy as jnp
from jax.experimental import pallas as pl
from jax.experimental.pallas import tpu as pltpu


def _infonce_kernel(inv_t_ref, z_ref, zsim_ref, zneg_ref,
                    loss_pos_ref, loss_neg_ref,
                    m_scr, l_scr, pos_scr):
    """Grid = (N_tiles, M_tiles); M (negatives) is the streamed reduction axis."""
    j = pl.program_id(1)
    last_j = pl.num_programs(1) - 1

    inv_t = inv_t_ref[0]                                   # SMEM scalar (f32)

    # Scale z once by 1/temperature (f32), keep a native-dtype copy for the MXU.
    zf = z_ref[...].astype(jnp.float32) * inv_t            # (tn, D) f32, scaled
    z_scaled = zf.astype(z_ref.dtype)                      # native dtype for MXU

    # First M-block: initialize the online logsumexp with the positive logit
    # (the "extra column" of the concat) and remember pos for the output.
    @pl.when(j == 0)
    def _init():
        pos_s = jnp.sum(zf * zsim_ref[...].astype(jnp.float32),
                        axis=1, keepdims=True)             # (tn, 1) f32
        pos_scr[...] = pos_s
        m_scr[...] = pos_s                                 # running max
        l_scr[...] = jnp.ones_like(l_scr)                  # exp(pos - pos) = 1

    # scores = (z / T) @ z_neg^T, contracting last dims (no explicit transpose).
    s = jax.lax.dot_general(
        z_scaled, zneg_ref[...],
        dimension_numbers=(((1,), (1,)), ((), ())),
        preferred_element_type=jnp.float32)                # (tn, tm) f32

    # Online (flash-style) logsumexp update over this M block.
    m_prev = m_scr[...]
    m_new = jnp.maximum(m_prev, jnp.max(s, axis=1, keepdims=True))
    l_scr[...] = (l_scr[...] * jnp.exp(m_prev - m_new)
                  + jnp.sum(jnp.exp(s - m_new), axis=1, keepdims=True))
    m_scr[...] = m_new

    # Last M-block: finalize per-row losses.
    @pl.when(j == last_j)
    def _finalize():
        loss_neg_ref[...] = m_scr[...] + jnp.log(l_scr[...])
        loss_pos_ref[...] = -pos_scr[...]


def _choose_tile(total, target):
    """Largest divisor of `total` that is <= target and a multiple of 8,
    falling back to the full extent (always a legal block)."""
    if total <= target:
        return total
    for t in range(min(target, total), 7, -1):
        if total % t == 0 and t % 8 == 0:
            return t
    return total


def infonce_loss(z_recovered, z_sim_recovered, z_neg_recovered, temperature,
                 *, n_tile_target=256, m_tile_target=1024):
    """Pallas equivalent of InfoNceLoss.forward.

    Returns (pos_component, neg_component, total_loss) as device scalars.
    """
    N, D = z_recovered.shape
    M, _ = z_neg_recovered.shape

    tn = _choose_tile(N, n_tile_target)
    tm = _choose_tile(M, m_tile_target)
    grid = (N // tn, M // tm)

    # Temperature as data (SMEM scalar prefetch) -> no recompile per value.
    inv_t = (1.0 / jnp.asarray(temperature, dtype=jnp.float32)).reshape(1)

    loss_pos, loss_neg = pl.pallas_call(
        _infonce_kernel,
        out_shape=(jax.ShapeDtypeStruct((N, 1), jnp.float32),
                   jax.ShapeDtypeStruct((N, 1), jnp.float32)),
        grid_spec=pltpu.PrefetchScalarGridSpec(
            num_scalar_prefetch=1,
            grid=grid,
            in_specs=[
                pl.BlockSpec((tn, D), lambda i, j, inv_t: (i, 0)),   # z
                pl.BlockSpec((tn, D), lambda i, j, inv_t: (i, 0)),   # z_sim
                pl.BlockSpec((tm, D), lambda i, j, inv_t: (j, 0)),   # z_neg
            ],
            out_specs=[
                pl.BlockSpec((tn, 1), lambda i, j, inv_t: (i, 0)),   # loss_pos
                pl.BlockSpec((tn, 1), lambda i, j, inv_t: (i, 0)),   # loss_neg
            ],
            scratch_shapes=[
                pltpu.VMEM((tn, 1), jnp.float32),   # running max (m)
                pltpu.VMEM((tn, 1), jnp.float32),   # running sum-exp (l)
                pltpu.VMEM((tn, 1), jnp.float32),   # pos logits
            ],
        ),
        compiler_params=pltpu.CompilerParams(
            dimension_semantics=("parallel", "arbitrary")),
    )(inv_t, z_recovered, z_sim_recovered, z_neg_recovered)

    pos_component = jnp.mean(loss_pos)
    neg_component = jnp.mean(loss_neg)
    total_loss = pos_component + neg_component
    return pos_component, neg_component, total_loss


def _reference(z, z_sim, z_neg, temperature):
    neg = jnp.einsum('ij,kj->ik', z, z_neg)
    pos = jnp.einsum('ij,ij->i', z, z_sim)
    neg_and_pos = jnp.concatenate([neg, pos[:, None]], axis=1)
    loss_pos = -pos / temperature
    loss_neg = jax.scipy.special.logsumexp(neg_and_pos / temperature, axis=1)
    return (jnp.mean(loss_pos), jnp.mean(loss_neg), jnp.mean(loss_pos + loss_neg))


if __name__ == "__main__":
    key = jax.random.PRNGKey(0)
    k1, k2, k3 = jax.random.split(key, 3)

    N, M, D = 8, 8, 32          # small shapes consistent with the module
    temperature = 0.5

    z_recovered = jax.random.normal(k1, (N, D), dtype=jnp.float32)
    z_sim_recovered = jax.random.normal(k2, (N, D), dtype=jnp.float32)
    z_neg_recovered = jax.random.normal(k3, (M, D), dtype=jnp.float32)

    pos_c, neg_c, total = infonce_loss(
        z_recovered, z_sim_recovered, z_neg_recovered, temperature)
    total = jax.block_until_ready(total)

    # Sanity check against pure-JAX reference.
    ref_pos, ref_neg, ref_total = _reference(
        z_recovered, z_sim_recovered, z_neg_recovered, temperature)
    assert abs(float(pos_c) - float(ref_pos)) < 1e-4
    assert abs(float(neg_c) - float(ref_neg)) < 1e-4
    assert abs(float(total) - float(ref_total)) < 1e-4

    print("KERNEL_OK")
</pallas_src>

<mosaic_0001>
module attributes {stable_mosaic.version = 11 : i64} {
  func.func @_infonce_kernel(%arg0: i32, %arg1: i32, %arg2: memref<1xf32, #tpu.memory_space<smem>>, %arg3: memref<8x32xf32, #tpu.memory_space<vmem>>, %arg4: memref<8x32xf32, #tpu.memory_space<vmem>>, %arg5: memref<8x32xf32, #tpu.memory_space<vmem>>, %arg6: memref<8x1xf32, #tpu.memory_space<vmem>>, %arg7: memref<8x1xf32, #tpu.memory_space<vmem>>, %arg8: memref<8x1xf32, #tpu.memory_space<vmem>>, %arg9: memref<8x1xf32, #tpu.memory_space<vmem>>, %arg10: memref<8x1xf32, #tpu.memory_space<vmem>>) attributes {dimension_semantics = [#tpu.dimension_semantics<parallel>, #tpu.dimension_semantics<arbitrary>], iteration_bounds = array<i64: 1, 1>, scalar_prefetch = 1 : i64, scratch_operands = 3 : i64, tpu.core_type = #tpu.core_type<tc>, window_params = [{transform_indices = @transform_0, window_bounds = array<i64: 8, 32>}, {transform_indices = @transform_1, window_bounds = array<i64: 8, 32>}, {transform_indices = @transform_2, window_bounds = array<i64: 8, 32>}, {transform_indices = @transform_3, window_bounds = array<i64: 8, 1>}, {transform_indices = @transform_4, window_bounds = array<i64: 8, 1>}]} {
    %c0 = arith.constant 0 : index
    %0 = memref.load %arg2[%c0] : memref<1xf32, #tpu.memory_space<smem>>
    %c0_0 = arith.constant 0 : index
    %c0_1 = arith.constant 0 : index
    %1 = vector.load %arg3[%c0_0, %c0_1] : memref<8x32xf32, #tpu.memory_space<vmem>>, vector<8x32xf32>
    %2 = vector.broadcast %0 : f32 to vector<8x32xf32>
    %3 = arith.mulf %1, %2 : vector<8x32xf32>
    %c0_i32 = arith.constant 0 : i32
    %4 = arith.cmpi eq, %arg1, %c0_i32 : i32
    %5 = arith.extui %4 : i1 to i32
    %c0_i32_2 = arith.constant 0 : i32
    %6 = arith.cmpi ne, %5, %c0_i32_2 : i32
    scf.if %6 {
      %c0_17 = arith.constant 0 : index
      %c0_18 = arith.constant 0 : index
      %28 = vector.load %arg4[%c0_17, %c0_18] : memref<8x32xf32, #tpu.memory_space<vmem>>, vector<8x32xf32>
      %29 = arith.mulf %3, %28 : vector<8x32xf32>
      %cst_19 = arith.constant dense<0.000000e+00> : vector<8xf32>
      %30 = vector.multi_reduction <add>, %29, %cst_19 [1] : vector<8x32xf32> to vector<8xf32>
      %31 = vector.shape_cast %30 : vector<8xf32> to vector<8x1xf32>
      %c0_20 = arith.constant 0 : index
      %c0_21 = arith.constant 0 : index
      %32 = vector.load %arg10[%c0_20, %c0_21] : memref<8x1xf32, #tpu.memory_space<vmem>>, vector<8x1xf32>
      tpu.vector_store %arg10[%c0_20, %c0_21], %31 {strides = array<i32>} : memref<8x1xf32, #tpu.memory_space<vmem>>, vector<8x1xf32>,
      %c0_22 = arith.constant 0 : index
      %c0_23 = arith.constant 0 : index
      %33 = vector.load %arg8[%c0_22, %c0_23] : memref<8x1xf32, #tpu.memory_space<vmem>>, vector<8x1xf32>
      tpu.vector_store %arg8[%c0_22, %c0_23], %31 {strides = array<i32>} : memref<8x1xf32, #tpu.memory_space<vmem>>, vector<8x1xf32>,
      %cst_24 = arith.constant 1.000000e+00 : f32
      %34 = vector.broadcast %cst_24 : f32 to vector<8x1xf32>
      %c0_25 = arith.constant 0 : index
      %c0_26 = arith.constant 0 : index
      %35 = vector.load %arg9[%c0_25, %c0_26] : memref<8x1xf32, #tpu.memory_space<vmem>>, vector<8x1xf32>
      tpu.vector_store %arg9[%c0_25, %c0_26], %34 {strides = array<i32>} : memref<8x1xf32, #tpu.memory_space<vmem>>, vector<8x1xf32>,
    } else {
    }
    %c0_3 = arith.constant 0 : index
    %c0_4 = arith.constant 0 : index
    %7 = vector.load %arg5[%c0_3, %c0_4] : memref<8x32xf32, #tpu.memory_space<vmem>>, vector<8x32xf32>
    %cst = arith.constant dense<0.000000e+00> : vector<8x8xf32>
    %8 = tpu.matmul %3, %7, %cst {dimension_numbers = #tpu.dot_dimension_numbers<[1], [1], [0], [0], [0, 0, 1, 0], [], []>} : vector<8x32xf32>, vector<8x32xf32>, vector<8x8xf32> -> vector<8x8xf32>
    %c0_5 = arith.constant 0 : index
    %c0_6 = arith.constant 0 : index
    %9 = vector.load %arg8[%c0_5, %c0_6] : memref<8x1xf32, #tpu.memory_space<vmem>>, vector<8x1xf32>
    %cst_7 = arith.constant dense<0xFF800000> : vector<8xf32>
    %10 = vector.multi_reduction <maximumf>, %8, %cst_7 [1] : vector<8x8xf32> to vector<8xf32>
    %11 = vector.shape_cast %10 : vector<8xf32> to vector<8x1xf32>
    %12 = arith.maximumf %9, %11 : vector<8x1xf32>
    %c0_8 = arith.constant 0 : index
    %c0_9 = arith.constant 0 : index
    %13 = vector.load %arg9[%c0_8, %c0_9] : memref<8x1xf32, #tpu.memory_space<vmem>>, vector<8x1xf32>
    %14 = arith.subf %9, %12 : vector<8x1xf32>
    %15 = math.exp %14 : vector<8x1xf32>
    %16 = arith.mulf %13, %15 : vector<8x1xf32>
    %17 = vector.broadcast %12 : vector<8x1xf32> to vector<8x8xf32>
    %18 = arith.subf %8, %17 : vector<8x8xf32>
    %19 = math.exp %18 : vector<8x8xf32>
    %cst_10 = arith.constant dense<0.000000e+00> : vector<8xf32>
    %20 = vector.multi_reduction <add>, %19, %cst_10 [1] : vector<8x8xf32> to vector<8xf32>
    %21 = vector.shape_cast %20 : vector<8xf32> to vector<8x1xf32>
    %22 = arith.addf %16, %21 : vector<8x1xf32>
    %c0_11 = arith.constant 0 : index
    %c0_12 = arith.constant 0 : index
    %23 = vector.load %arg9[%c0_11, %c0_12] : memref<8x1xf32, #tpu.memory_space<vmem>>, vector<8x1xf32>
    tpu.vector_store %arg9[%c0_11, %c0_12], %22 {strides = array<i32>} : memref<8x1xf32, #tpu.memory_space<vmem>>, vector<8x1xf32>,
    %c0_13 = arith.constant 0 : index
    %c0_14 = arith.constant 0 : index
    %24 = vector.load %arg8[%c0_13, %c0_14] : memref<8x1xf32, #tpu.memory_space<vmem>>, vector<8x1xf32>
    tpu.vector_store %arg8[%c0_13, %c0_14], %12 {strides = array<i32>} : memref<8x1xf32, #tpu.memory_space<vmem>>, vector<8x1xf32>,
    %c0_i32_15 = arith.constant 0 : i32
    %25 = arith.cmpi eq, %arg1, %c0_i32_15 : i32
    %26 = arith.extui %25 : i1 to i32
    %c0_i32_16 = arith.constant 0 : i32
    %27 = arith.cmpi ne, %26, %c0_i32_16 : i32
    scf.if %27 {
      %c0_17 = arith.constant 0 : index
      %c0_18 = arith.constant 0 : index
      %28 = vector.load %arg8[%c0_17, %c0_18] : memref<8x1xf32, #tpu.memory_space<vmem>>, vector<8x1xf32>
      %c0_19 = arith.constant 0 : index
      %c0_20 = arith.constant 0 : index
      %29 = vector.load %arg9[%c0_19, %c0_20] : memref<8x1xf32, #tpu.memory_space<vmem>>, vector<8x1xf32>
      %30 = math.log %29 : vector<8x1xf32>
      %31 = arith.addf %28, %30 : vector<8x1xf32>
      %c0_21 = arith.constant 0 : index
      %c0_22 = arith.constant 0 : index
      %32 = vector.load %arg7[%c0_21, %c0_22] : memref<8x1xf32, #tpu.memory_space<vmem>>, vector<8x1xf32>
      tpu.vector_store %arg7[%c0_21, %c0_22], %31 {strides = array<i32>} : memref<8x1xf32, #tpu.memory_space<vmem>>, vector<8x1xf32>,
      %c0_23 = arith.constant 0 : index
      %c0_24 = arith.constant 0 : index
      %33 = vector.load %arg10[%c0_23, %c0_24] : memref<8x1xf32, #tpu.memory_space<vmem>>, vector<8x1xf32>
      %cst_25 = arith.constant 0.000000e+00 : f32
      %34 = vector.broadcast %cst_25 : f32 to vector<8x1xf32>
      %35 = arith.subf %34, %33 : vector<8x1xf32>
      %c0_26 = arith.constant 0 : index
      %c0_27 = arith.constant 0 : index
      %36 = vector.load %arg6[%c0_26, %c0_27] : memref<8x1xf32, #tpu.memory_space<vmem>>, vector<8x1xf32>
      tpu.vector_store %arg6[%c0_26, %c0_27], %35 {strides = array<i32>} : memref<8x1xf32, #tpu.memory_space<vmem>>, vector<8x1xf32>,
    } else {
    }
    return
  }
  func.func @transform_0(%arg0: i32, %arg1: i32, %arg2: memref<1xf32, #tpu.memory_space<smem>>) -> (i32, i32) {
    %c0_i32 = arith.constant 0 : i32
    %c0_i32_0 = arith.constant 0 : i32
    return %arg0, %c0_i32 : i32, i32
  }
  func.func @transform_1(%arg0: i32, %arg1: i32, %arg2: memref<1xf32, #tpu.memory_space<smem>>) -> (i32, i32) {
    %c0_i32 = arith.constant 0 : i32
    %c0_i32_0 = arith.constant 0 : i32
    return %arg0, %c0_i32 : i32, i32
  }
  func.func @transform_2(%arg0: i32, %arg1: i32, %arg2: memref<1xf32, #tpu.memory_space<smem>>) -> (i32, i32) {
    %c0_i32 = arith.constant 0 : i32
    %c0_i32_0 = arith.constant 0 : i32
    return %arg1, %c0_i32 : i32, i32
  }
  func.func @transform_3(%arg0: i32, %arg1: i32, %arg2: memref<1xf32, #tpu.memory_space<smem>>) -> (i32, i32) {
    %c0_i32 = arith.constant 0 : i32
    %c0_i32_0 = arith.constant 0 : i32
    return %arg0, %c0_i32 : i32, i32
  }
  func.func @transform_4(%arg0: i32, %arg1: i32, %arg2: memref<1xf32, #tpu.memory_space<smem>>) -> (i32, i32) {
    %c0_i32 = arith.constant 0 : i32
    %c0_i32_0 = arith.constant 0 : i32
    return %arg0, %c0_i32 : i32, i32
  }
}

</mosaic_0001>

<llo_original>
// kernel: tpu_custom_call.1
$region0: #{tpu_custom_call.1}
  #allocation0 [shape = 'u32[]', space=smem, size = 0x4, offset = 0x4, fixed_abs, tag = 'smem constant byte address 0x4 - core index']
  #allocation1 [shape = 'u32[144,128]{1,0:T(1,128)}', space=vmem, size = 0x12000, scoped, tag = 'internal scratch']
  #allocation2 [shape = 'f32[8,1]{1,0:T(8,128)}', space=vmem, size = 0x1000, scoped, tag = 'scratch operand']
  #allocation3 [shape = 'f32[8,1]{1,0:T(8,128)}', space=vmem, size = 0x1000, scoped, tag = 'scratch operand']
  #allocation4 [shape = 'f32[8,1]{1,0:T(8,128)}', space=vmem, size = 0x1000, scoped, tag = 'scratch operand']
  #allocation5 [shape = 's32[1]{0}', space=sflag, size = 0x4, scoped, tag = 'scoped memory for tpu_custom_call.1']
  #allocation6 [shape = 'f32[1]{0:T(128)S(6)}', space=smem, size = 0x200, scoped, tag = 'prefetched SMEM operand 0']
  %s0 = inlined_call_operand.<no memory space> [shape: f32[1], index: 0, kind: input, shape index: {}]
  %s1 = inlined_call_operand.hbm [shape: f32[8,32], index: 1, kind: input, shape index: {}]
  %s2 = inlined_call_operand.hbm [shape: f32[8,32], index: 2, kind: input, shape index: {}]
  %s3 = inlined_call_operand.hbm [shape: f32[8,32], index: 3, kind: input, shape index: {}]
  %s4 = inlined_call_operand.vmem [shape: f32[8,1], index: 4, kind: output, shape index: {0}]
  %s5 = inlined_call_operand.vmem [shape: f32[8,1], index: 5, kind: output, shape index: {1}]
  %6 = xla_tuple %s4, %s5
  %s7 = sld [smem:[#allocation0]]
  $region50: #{tpu_custom_call.1} parent=0
    _
  %s9 = ssub.s32 1, %s7
  %s10 = scalar_select 0, %s9, %s7
  %11 = sst [smem:[#allocation6]] %s0
  $region1: #{tpu_custom_call.1} parent=0
    #allocation7 [shape = 'u8[4096]{0}', space=vmem, size = 0x1000, scoped, tag = 'input window, operand 1, single buffered']
    #allocation8 [shape = 's32[1]{0}', space=sflag, size = 0x4, scoped, tag = 'scoped memory for tpu_custom_call.1']
    #allocation9 [shape = 'u8[4096]{0}', space=vmem, size = 0x1000, scoped, tag = 'input window, operand 2, single buffered']
    #allocation10 [shape = 's32[1]{0}', space=sflag, size = 0x4, scoped, tag = 'scoped memory for tpu_custom_call.1']
    #allocation11 [shape = 'u8[4096]{0}', space=vmem, size = 0x1000, scoped, tag = 'input window, operand 3, single buffered']
    %12 = vsyncpa [#allocation8], 0
    %13 = vsyncpa [#allocation10], 0
    // Predicated region
    $region2: #{tpu_custom_call.1} parent=1 // pred_check
      _
    $region3: #{tpu_custom_call.1} parent=1 // pred_check_branch
      %15 = sbr.rel (0) target = $region5
    $region4: #{tpu_custom_call.1} parent=1 // pred_region
      %s17 = ssub.s32 128, 128
      %18 = vsyncadd [#allocation8], %s17
      %s20 = sshll.u32 [#allocation7], 4
      %s21 = int_to_ptr.vmem [resolvable:$true] %s20
      %23 = dma.hbm_to_vmem [thread:$0]  %s1, 128, %s21, [#allocation8]
    $region5: #{tpu_custom_call.1} parent=1 // pred_fallthru
      _
    // Predicated region
    $region6: #{tpu_custom_call.1} parent=1 // pred_check
      _
    $region7: #{tpu_custom_call.1} parent=1 // pred_check_branch
      %25 = sbr.rel (0) target = $region9
    $region8: #{tpu_custom_call.1} parent=1 // pred_region
      %s27 = ssub.s32 128, 128
      %28 = vsyncadd [#allocation10], %s27
      %s30 = sshll.u32 [#allocation9], 4
      %s31 = int_to_ptr.vmem [resolvable:$true] %s30
      %33 = dma.hbm_to_vmem [thread:$0]  %s2, 128, %s31, [#allocation10]
    $region9: #{tpu_custom_call.1} parent=1 // pred_fallthru
      _
    // Predicated region
    $region10: #{tpu_custom_call.1} parent=1 // pred_check
      _
    $region11: #{tpu_custom_call.1} parent=1 // pred_check_branch
      %35 = sbr.rel (0) target = $region13
    $region12: #{tpu_custom_call.1} parent=1 // pred_region
      %s37 = ssub.s32 128, 128
      %38 = vsyncadd [#allocation10], %s37
      %s40 = sshll.u32 [#allocation11], 4
      %s41 = int_to_ptr.vmem [resolvable:$true] %s40
      %43 = dma.hbm_to_vmem [thread:$0]  %s3, 128, %s41, [#allocation10]
    $region13: #{tpu_custom_call.1} parent=1 // pred_fallthru
      _
    // Predicated region
    $region14: #{tpu_custom_call.1} parent=1 // pred_check
      _
    $region15: #{tpu_custom_call.1} parent=1 // pred_check_branch
      %45 = sbr.rel (0) target = $region17
    $region16: #{tpu_custom_call.1} parent=1 // pred_region
      %46 = dma.done [#allocation8], 128
    $region17: #{tpu_custom_call.1} parent=1 // pred_fallthru
      _
    // Predicated region
    $region18: #{tpu_custom_call.1} parent=1 // pred_check
      _
    $region19: #{tpu_custom_call.1} parent=1 // pred_check_branch
      %48 = sbr.rel (0) target = $region21
    $region20: #{tpu_custom_call.1} parent=1 // pred_region
      %49 = dma.done [#allocation10], 128
    $region21: #{tpu_custom_call.1} parent=1 // pred_fallthru
      _
    // Predicated region
    $region22: #{tpu_custom_call.1} parent=1 // pred_check
      _
    $region23: #{tpu_custom_call.1} parent=1 // pred_check_branch
      %51 = sbr.rel (0) target = $region25
    $region24: #{tpu_custom_call.1} parent=1 // pred_region
      %52 = dma.done [#allocation10], 128
    $region25: #{tpu_custom_call.1} parent=1 // pred_fallthru
      _
    %s53 = sld [smem:[#allocation6]]
    %v54 = vld [vmem:[#allocation7] sm:$0xff]
    %v55 = vstv %s53
    %v56 = vmul.f32 %v54, %v55
    %p57 = scmp.eq.s32.totalorder 0, 0
    // Predicated region
    $region26: #{tpu_custom_call.1} parent=1 // pred_check
      %p58 = pneg %p57
    $region27: #{tpu_custom_call.1} parent=1 // pred_check_branch
      %60 = sbr.rel (%p58) target = $region29
    $region28: #{tpu_custom_call.1} parent=1 // pred_region
      %v61 = vld [vmem:[#allocation9] sm:$0xff]
      %v62 = vmul.f32 %v56, %v61
      %vm63 = vcmask 261120
      %v64 = vsel %vm63, %v62, 0.0
      %65 = vadd.xlane.f32.xlu0 %v64
      %v66 = vpop.xlane.xlu0 %65
      %vm67 = vcmask 7168
      %68 = vst.msk [vmem:[#allocation4] sm:$0xff] %vm67, %v66
      %69 = vst.msk [vmem:[#allocation2] sm:$0xff] %vm67, %v66
      %70 = vst.msk [vmem:[#allocation3] sm:$0xff] %vm67, 1.0
    $region29: #{tpu_custom_call.1} parent=1 // pred_fallthru
      _
    %v71 = vld [vmem:[#allocation11] sm:$0xff]
    %vm72 = vcmask 261120
    %v74 = vsel %vm72, %v56, 0
    %v77 = vsel %vm72, %v71, 0
    %79 = vmatprep.subr.mxu0 0.0
    %80 = vmatpush1.xpose.msra.mxu0 0.0
    %81 = vmatprep.subr.mxu0 0.0
    %82 = vmatpush1.xpose.msra.mxu0 0.0
    %83 = vmatprep.subr.mxu0 0.0
    %84 = vmatpush1.xpose.msra.mxu0 0.0
    %85 = vmatprep.subr.mxu0 0.0
    %86 = vmatpush1.xpose.msra.mxu0 0.0
    %87 = vmatprep.subr.mxu0 0.0
    %88 = vmatpush1.xpose.msra.mxu0 0.0
    %89 = vmatprep.subr.mxu0 0.0
    %90 = vmatpush1.xpose.msra.mxu0 0.0
    %91 = vmatprep.subr.mxu0 0.0
    %92 = vmatpush1.xpose.msra.mxu0 0.0
    %93 = vmatprep.subr.mxu0 0.0
    %94 = vmatpush1.xpose.msra.mxu0 0.0
    %95 = vmatprep.subr.mxu0 0.0
    %96 = vmatpush1.xpose.msra.mxu0 0.0
    %97 = vmatprep.subr.mxu0 0.0
    %98 = vmatpush1.xpose.msra.mxu0 0.0
    %99 = vmatprep.subr.mxu0 0.0
    %100 = vmatpush1.xpose.msra.mxu0 0.0
    %101 = vmatprep.subr.mxu0 0.0
    %102 = vmatpush1.xpose.msra.mxu0 0.0
    %103 = vmatprep.subr.mxu0 0.0
    %104 = vmatpush1.xpose.msra.mxu0 0.0
    %105 = vmatprep.subr.mxu0 0.0
    %106 = vmatpush1.xpose.msra.mxu0 0.0
    %107 = vmatprep.subr.mxu0 0.0
    %108 = vmatpush1.xpose.msra.mxu0 0.0
    %109 = vmatprep.subr.mxu0 0.0
    %110 = vmatpush1.xpose.msra.mxu0 %v77
    %111 = vmatprep.subr.mxu0 0.0
    %112 = vmatpush2.xpose.msra.mxu0 0.0
    %113 = vmatprep.subr.mxu0 0.0
    %114 = vmatpush2.xpose.msra.mxu0 0.0
    %115 = vmatprep.subr.mxu0 0.0
    %116 = vmatpush2.xpose.msra.mxu0 0.0
    %117 = vmatprep.subr.mxu0 0.0
    %118 = vmatpush2.xpose.msra.mxu0 0.0
    %119 = vmatprep.subr.mxu0 0.0
    %120 = vmatpush2.xpose.msra.mxu0 0.0
    %121 = vmatprep.subr.mxu0 0.0
    %122 = vmatpush2.xpose.msra.mxu0 0.0
    %123 = vmatprep.subr.mxu0 0.0
    %124 = vmatpush2.xpose.msra.mxu0 0.0
    %125 = vmatprep.subr.mxu0 0.0
    %126 = vmatpush2.xpose.msra.mxu0 0.0
    %127 = vmatprep.subr.mxu0 0.0
    %128 = vmatpush2.xpose.msra.mxu0 0.0
    %129 = vmatprep.subr.mxu0 0.0
    %130 = vmatpush2.xpose.msra.mxu0 0.0
    %131 = vmatprep.subr.mxu0 0.0
    %132 = vmatpush2.xpose.msra.mxu0 0.0
    %133 = vmatprep.subr.mxu0 0.0
    %134 = vmatpush2.xpose.msra.mxu0 0.0
    %135 = vmatprep.subr.mxu0 0.0
    %136 = vmatpush2.xpose.msra.mxu0 0.0
    %137 = vmatprep.subr.mxu0 0.0
    %138 = vmatpush2.xpose.msra.mxu0 0.0
    %139 = vmatprep.subr.mxu0 0.0
    %140 = vmatpush2.xpose.msra.mxu0 0.0
    %141 = vmatprep.subr.mxu0 0.0
    %142 = vmatpush2.xpose.msra.mxu0 0.0
    %143 = vmatprep.mubr.f32.mxu0 0.0
    %144 = vmatmul.mubr.f32.gmra.mxu0 %v74
    %v145 = vpop.f32.mrf.mxu0
    %v146 = vadd.f32 0.0, %v145
    %v147 = vpop.f32.mrf.mxu0
    %148 = vdwg.mxu0
    %v149 = vld [vmem:[#allocation2] sm:$0xff]
    %vm150 = vcmask 64512
    %v151 = vsel %vm150, %v146, -inf
    %152 = vmax.xlane.f32.xlu0 %v151
    %v153 = vpop.xlane.xlu0 %152
    %v154 = vmax.f32 %v149, %v153
    %v155 = vld [vmem:[#allocation3] sm:$0xff]
    %v156 = vsub.f32 %v149, %v154
    %v157 = vmul.f32 %v156, 1.442695
    %v158 = vpow.pop %v157
    %v159 = vmul.f32 %v155, %v158
    %161 = vset.pattern.permute.xlu0 0
    %162 = vperm.xlu0 %161, %v154
    %v163 = vpop.permute.xlu0 %162
    %v165 = vsub.f32 %v146, %v163
    %v166 = vmul.f32 %v165, 1.442695
    %v167 = vpow.pop %v166
    %v168 = vsel %vm150, %v167, 0.0
    %169 = vadd.xlane.f32.xlu0 %v168
    %v170 = vpop.xlane.xlu0 %169
    %v171 = vadd.f32 %v159, %v170
    %vm172 = vcmask 7168
    %173 = vst.msk [vmem:[#allocation3] sm:$0xff] %vm172, %v171
    %174 = vst.msk [vmem:[#allocation2] sm:$0xff] %vm172, %v154
    // Predicated region
    $region30: #{tpu_custom_call.1} parent=1 // pred_check
      %p175 = pneg %p57
    $region31: #{tpu_custom_call.1} parent=1 // pred_check_branch
      %177 = sbr.rel (%p175) target = $region33
    $region32: #{tpu_custom_call.1} parent=1 // pred_region
      %v178 = vld [vmem:[#allocation2] sm:$0xff]
      %v179 = vld [vmem:[#allocation3] sm:$0xff]
      %v180 = vlog2.pop %v179
      %v181 = vmul.f32 %v180, 0.6931472
      %v182 = vadd.f32 %v178, %v181
      %183 = vst.msk [vmem:[%s5] sm:$0xff] %vm172, %v182
      %v184 = vld [vmem:[#allocation4] sm:$0xff]
      %v185 = vsub.f32 0.0, %v184
      %186 = vst.msk [vmem:[%s4] sm:$0xff] %vm172, %v185
    $region33: #{tpu_custom_call.1} parent=1 // pred_fallthru
      _
    // Predicated region
    $region34: #{tpu_custom_call.1} parent=1 // pred_check
      _
    $region35: #{tpu_custom_call.1} parent=1 // pred_check_branch
      %188 = sbr.rel (0) target = $region37
    $region36: #{tpu_custom_call.1} parent=1 // pred_region
      _
    $region37: #{tpu_custom_call.1} parent=1 // pred_fallthru
      _
    // Predicated region
    $region38: #{tpu_custom_call.1} parent=1 // pred_check
      _
    $region39: #{tpu_custom_call.1} parent=1 // pred_check_branch
      %190 = sbr.rel (0) target = $region41
    $region40: #{tpu_custom_call.1} parent=1 // pred_region
      _
    $region41: #{tpu_custom_call.1} parent=1 // pred_fallthru
      _
    // Predicated region
    $region42: #{tpu_custom_call.1} parent=1 // pred_check
      _
    $region43: #{tpu_custom_call.1} parent=1 // pred_check_branch
      %192 = sbr.rel (0) target = $region45
    $region44: #{tpu_custom_call.1} parent=1 // pred_region
      _
    $region45: #{tpu_custom_call.1} parent=1 // pred_fallthru
      _
    // Predicated region
    $region46: #{tpu_custom_call.1} parent=1 // pred_check
      _
    $region47: #{tpu_custom_call.1} parent=1 // pred_check_branch
      %194 = sbr.rel (0) target = $region49
    $region48: #{tpu_custom_call.1} parent=1 // pred_region
      _
    $region49: #{tpu_custom_call.1} parent=1 // pred_fallthru
      _
    %195 = vsyncpa [#allocation8], 1
    %196 = vsyncpa [#allocation10], 1

</llo_original>
